<compile_context>
chip_gen: v6e
topology: v6e:2x2x1
jax: 0.10.0
libtpu: 0.0.40
codegen_flags: <defaults>
</compile_context>

<pallas_src>
import jax
import jax.numpy as jnp
from jax.experimental import pallas as pl
from jax.experimental.pallas import tpu as pltpu


_MAX_DMA_CHUNKS = 4            # max DMAs in flight for one copy
_MIN_CHUNK_BYTES = 1 << 20     # don't split copies below ~1 MiB per chunk


def _resolve_target_shape(target_shape, total):
    """torch.view-style shape resolution (single -1 allowed, strict check)."""
    tgt = list(target_shape)
    neg = [i for i, d in enumerate(tgt) if d == -1]
    if len(neg) > 1:
        raise ValueError("only one dimension may be -1 in view shape")
    if neg:
        known = 1
        for d in tgt:
            if d != -1:
                known *= d
        if known == 0 or total % known != 0:
            raise ValueError(
                f"shape {tuple(target_shape)} is invalid for input of size {total}")
        tgt[neg[0]] = total // known
    tgt = tuple(tgt)
    prod = 1
    for d in tgt:
        prod *= d
    if prod != total:
        raise ValueError(f"shape {tgt} is invalid for input of size {total}")
    return tgt


def _make_dma_copy_kernel(chunks):
    """Kernel issuing one HBM->HBM DMA per static (start, stop) chunk of axis 0.

    All chunk DMAs are started back-to-back (each on its own semaphore) and
    then waited on, so up to len(chunks) copies are in flight simultaneously.
    """
    def kernel(x_ref, o_ref, sems):
        if len(chunks) == 1:
            cp = pltpu.make_async_copy(x_ref, o_ref, sems.at[0])
            cp.start()
            cp.wait()
        else:
            copies = []
            for c, (lo, hi) in enumerate(chunks):
                cp = pltpu.make_async_copy(
                    x_ref.at[lo:hi], o_ref.at[lo:hi], sems.at[c])
                cp.start()
                copies.append(cp)
            for cp in copies:
                cp.wait()
    return kernel


def reshape_pallas(x, target_shape, *, materialize=False,
                   max_inflight=_MAX_DMA_CHUNKS,
                   min_chunk_bytes=_MIN_CHUNK_BYTES):
    """Semantics of torch.Tensor.view(target_shape) on a contiguous tensor.

    materialize=False (default): pure metadata reshape, no kernel (free).
    materialize=True: direct HBM->HBM DMA copy into a fresh buffer, then a
    free metadata reshape to the target shape.
    """
    total = x.size
    tgt = _resolve_target_shape(target_shape, total)

    if not materialize or total == 0:
        # Contiguous reshape is free in XLA; skip the 2x-HBM-traffic copy.
        return x.reshape(tgt)

    # Give 0-d inputs a leading axis to chunk over (metadata-only, free).
    src = x if x.ndim >= 1 else x.reshape(1)

    itemsize = jnp.dtype(x.dtype).itemsize
    nbytes = total * itemsize
    dim0 = src.shape[0]

    # Up to `max_inflight` contiguous leading-axis chunks, each >= min_chunk_bytes.
    nc = max(1, min(int(max_inflight), dim0,
                    max(1, nbytes // max(1, int(min_chunk_bytes)))))
    edges = [(i * dim0) // nc for i in range(nc + 1)]
    chunks = tuple((edges[i], edges[i + 1]) for i in range(nc))

    out = pl.pallas_call(
        _make_dma_copy_kernel(chunks),
        out_shape=jax.ShapeDtypeStruct(src.shape, src.dtype),
        in_specs=[pl.BlockSpec(memory_space=pl.ANY)],   # raw HBM ref, no auto-DMA
        out_specs=pl.BlockSpec(memory_space=pl.ANY),
        scratch_shapes=[pltpu.SemaphoreType.DMA((nc,))],
        cost_estimate=pl.CostEstimate(
            flops=0, transcendentals=0, bytes_accessed=2 * nbytes),
    )(src)

    # Final shape change is metadata-only.
    return out.reshape(tgt)


if __name__ == "__main__":
    key = jax.random.PRNGKey(0)

    # NCHW input: batch=2, channels=4, spatial=16x16 (HW2-style CNN feature map).
    x = jax.random.normal(key, (2, 4, 16, 16), dtype=jnp.float32)
    target_shape = (2, -1)
    ref = x.reshape(2, -1)

    # Pallas DMA-copy path (single DMA at this size).
    out = jax.block_until_ready(reshape_pallas(x, target_shape, materialize=True))
    assert out.shape == (2, 4 * 16 * 16), out.shape
    assert out.dtype == ref.dtype
    assert jnp.array_equal(out, ref), "mismatch vs reference reshape (DMA path)"

    # Default metadata-only path (free).
    out_fast = jax.block_until_ready(reshape_pallas(x, target_shape))
    assert jnp.array_equal(out_fast, ref), "mismatch vs reference reshape (fast path)"

    # Exercise the multi-DMA (chunked) path on a slightly larger input by
    # lowering the per-chunk byte floor (still small: 8*32*32 f32 = 32 KiB).
    x2 = jax.random.normal(jax.random.PRNGKey(0), (8, 32, 32), dtype=jnp.float32)
    ref2 = x2.reshape(-1, 32)
    out2 = jax.block_until_ready(
        reshape_pallas(x2, (-1, 32), materialize=True, min_chunk_bytes=4096))
    assert out2.shape == ref2.shape
    assert jnp.array_equal(out2, ref2), "mismatch vs reference reshape (chunked DMA)"

    print("KERNEL_OK")
</pallas_src>

<mosaic_0001>
module attributes {stable_mosaic.version = 11 : i64} {
  func.func @kernel(%arg0: memref<2x4x16x16xf32, #tpu.memory_space<any>>, %arg1: memref<2x4x16x16xf32, #tpu.memory_space<any>>, %arg2: memref<1x!tpu.dma_semaphore, #tpu.memory_space<semaphore_mem>>) attributes {dimension_semantics = [], scalar_prefetch = 0 : i64, scratch_operands = 1 : i64, tpu.core_type = #tpu.core_type<tc>} {
    %c0_i32 = arith.constant 0 : i32
    %0 = tpu.memref_slice %arg2[%c0_i32] : memref<1x!tpu.dma_semaphore, #tpu.memory_space<semaphore_mem>> -> memref<1x!tpu.dma_semaphore, #tpu.memory_space<semaphore_mem>>
    %1 = tpu.memref_squeeze %0 : memref<1x!tpu.dma_semaphore, #tpu.memory_space<semaphore_mem>> -> memref<!tpu.dma_semaphore, #tpu.memory_space<semaphore_mem>>
    tpu.enqueue_dma source(%arg0 : memref<2x4x16x16xf32, #tpu.memory_space<any>>) target(%arg1 : memref<2x4x16x16xf32, #tpu.memory_space<any>>) target_semaphore(%1 : memref<!tpu.dma_semaphore, #tpu.memory_space<semaphore_mem>>)
    %c0_i32_0 = arith.constant 0 : i32
    %2 = tpu.memref_slice %arg2[%c0_i32_0] : memref<1x!tpu.dma_semaphore, #tpu.memory_space<semaphore_mem>> -> memref<1x!tpu.dma_semaphore, #tpu.memory_space<semaphore_mem>>
    %3 = tpu.memref_squeeze %2 : memref<1x!tpu.dma_semaphore, #tpu.memory_space<semaphore_mem>> -> memref<!tpu.dma_semaphore, #tpu.memory_space<semaphore_mem>>
    tpu.wait_dma2 semaphore(%3 : memref<!tpu.dma_semaphore, #tpu.memory_space<semaphore_mem>>) src(%arg0 : memref<2x4x16x16xf32, #tpu.memory_space<any>>) dst(%arg1 : memref<2x4x16x16xf32, #tpu.memory_space<any>>)
    return
  }
}

</mosaic_0001>

<llo_original>
// kernel: tpu_custom_call.1
$region0: #{tpu_custom_call.1}
  #allocation0 [shape = 'u32[]', space=smem, size = 0x4, offset = 0x4, fixed_abs, tag = 'smem constant byte address 0x4 - core index']
  #allocation1 [shape = 'u32[144,128]{1,0:T(1,128)}', space=vmem, size = 0x12000, scoped, tag = 'internal scratch']
  #allocation2 [shape = 's32[1]{0}', space=sflag, size = 0x4, scoped, tag = 'scratch operand']
  #allocation3 [shape = 's32[]', space=sflag, size = 0x4, offset = 0, fixed_abs, tag = 'sflag constant byte address 0x0 - dummy sync flag']
  #allocation4 [shape = 'u32[0]{0}', space=smem, size = 0, offset = 0, fixed_abs, tag = 'smem constant byte address 0x0 - null']
  %s0 = inlined_call_operand.hbm [shape: f32[2,4,16,16], index: 0, kind: input, shape index: {}]
  %s1 = inlined_call_operand.hbm [shape: f32[2,4,16,16], index: 1, kind: output, shape index: {}]
  %s2 = sld [smem:[#allocation0]]
  $region2: #{tpu_custom_call.1} parent=0
    _
  %s4 = ssub.s32 1, %s2
  %s5 = scalar_select 0, %s4, %s2
  %s7 = sshll.u32 1, 14
  %s8 = sxor.u32 4294967295, %s7
  %12 = dma.general %s0, 2048, %s1, [#allocation2], 131072, [#allocation4], 0, 0
  %s13 = smul.u32 2, 4
  %s14 = smul.u32 %s13, 16
  %s15 = smul.u32 %s14, 1
  %s16 = sshll.u32 %s15, 4
  %17 = dma.done [#allocation2], %s16
  %18 = vsyncmov [#allocation2]
  %s19 = vpop.sfrf %18
  %p20 = scmp.eq.s32.totalorder %s19, 0
  %p21 = pneg %p20
  %23 = shalt.err (%p21)

</llo_original>
